<compile_context>
chip_gen: v7x
topology: tpu7x:2x2x1
jax: 0.10.0
libtpu: 0.0.40
codegen_flags: <defaults>
</compile_context>

<pallas_src>
import functools

import jax
import jax.numpy as jnp
from jax.experimental import pallas as pl
from jax.experimental.pallas import tpu as pltpu


def _conv_block_kernel(x_ref, m_ref, b_ref, o_ref):
    # x_ref: (bt, H, W*Cin)       input tile, channels-last / W-major lanes
    # m_ref: (W*Cin, 3*W*Cout)    banded weights [M_ky0 | M_ky1 | M_ky2]
    # b_ref: (1, W*Cout)          bias tiled along W (f32)
    # o_ref: (bt, H, W*Cout)      output tile (lane-dense)
    bt, h, w_cin = x_ref.shape
    w_cout = o_ref.shape[-1]
    rows = bt * h

    x2 = x_ref[...].reshape(rows, w_cin)

    # Single MXU contraction for all 9 taps: K = W*Cin, N = 3*W*Cout.
    y = jnp.dot(x2, m_ref[...], preferred_element_type=jnp.float32)
    y0 = y[:, :w_cout]               # ky = 0 taps (need input row h-1)
    y1 = y[:, w_cout:2 * w_cout]     # ky = 1 taps (input row h)
    y2 = y[:, 2 * w_cout:]           # ky = 2 taps (need input row h+1)

    # H-side halo: +/-1 row shift via XLU roll on the sublane axis; the
    # top/bottom zero padding (and any wrap across image boundaries when
    # bt > 1) becomes a per-row mask.
    h_idx = jax.lax.broadcasted_iota(jnp.int32, (rows, 1), 0) % h
    acc = y1 + b_ref[...]                                        # bias in f32
    acc = acc + jnp.where(h_idx == 0, 0.0, pltpu.roll(y0, shift=1, axis=0))
    acc = acc + jnp.where(h_idx == h - 1, 0.0,
                          pltpu.roll(y2, shift=rows - 1, axis=0))

    acc = jnp.maximum(acc, 0.2 * acc)                            # LeakyReLU(0.2)
    o_ref[...] = acc.reshape(bt, h, w_cout).astype(o_ref.dtype)


def _build_band_weight(weight, W):
    """(Cout, Cin, 3, 3) -> (W*Cin, 3*W*Cout) block-banded weight.

    Column group ky holds M_ky with
      M_ky[w_in*Cin + ci, w_out*Cout + co] = weight[co, ci, ky, w_in - w_out + 1]
    for |w_in - w_out| <= 1, else 0.  The W-axis padding=1 is absorbed here
    (the padded columns simply never appear).
    """
    Cout, Cin = weight.shape[0], weight.shape[1]
    w_t = jnp.transpose(weight, (2, 3, 1, 0))                    # (3,3,Cin,Cout)
    dif = jnp.arange(W)[:, None] - jnp.arange(W)[None, :] + 1    # (W_in, W_out)
    valid = (dif >= 0) & (dif <= 2)
    kx = jnp.clip(dif, 0, 2)
    band = w_t[:, kx]                                            # (3,W,W,Cin,Cout)
    band = band * valid[None, :, :, None, None].astype(weight.dtype)
    band = band.transpose(0, 1, 3, 2, 4).reshape(3, W * Cin, W * Cout)
    # Concatenate the 3 ky groups on the output axis -> single in-kernel dot.
    return band.transpose(1, 0, 2).reshape(W * Cin, 3 * W * Cout)


@functools.partial(jax.jit, static_argnames=("compute_dtype",))
def conv_block_forward(x_nchw, weight, bias, *, compute_dtype=jnp.bfloat16):
    """ConvBlock forward (matches PyTorch Conv2d(k=3,s=1,p=1) + LeakyReLU(0.2)).

    x_nchw : (N, Cin, H, W)    float32
    weight : (Cout, Cin, 3, 3) float32   (PyTorch layout)
    bias   : (Cout,)           float32
    returns (N, Cout, H, W)    float32
    """
    N, Cin, H, W = x_nchw.shape
    Cout = weight.shape[0]
    w_cin, w_cout = W * Cin, W * Cout

    # Layout glue (kept only for the module's NCHW interface): one transpose
    # pass in, one out; no jnp.pad HBM pass (halo handled inside the kernel /
    # band matrix).  Everything here is under jit, so it compiles once.
    x_rows = jnp.transpose(x_nchw, (0, 2, 3, 1)).reshape(N, H, w_cin)
    m_cat = _build_band_weight(weight, W)                        # (W*Cin, 3*W*Cout)
    b_row = jnp.tile(bias, W).reshape(1, w_cout).astype(jnp.float32)

    # bf16 MXU operands; accumulation/epilogue stay f32.
    x_rows = x_rows.astype(compute_dtype)
    m_cat = m_cat.astype(compute_dtype)

    # Batch tile: fold batch into the matmul M-rows for bigger tiles, but keep
    # >= 2 parallel grid steps when the batch allows it (feeds both v7x TCs).
    rows_cap = 512
    bt = max(1, min(N, rows_cap // max(H, 1)))
    if N >= 2:
        bt = min(bt, max(1, N // 2))
    while N % bt:
        bt -= 1
    grid = (N // bt,)

    itemsize = jnp.dtype(compute_dtype).itemsize
    cost = pl.CostEstimate(
        flops=2 * N * H * w_cin * 3 * w_cout,
        transcendentals=0,
        bytes_accessed=(N * H * w_cin * itemsize
                        + w_cin * 3 * w_cout * itemsize
                        + w_cout * 4
                        + N * H * w_cout * 4),
    )

    out_rows = pl.pallas_call(
        _conv_block_kernel,
        out_shape=jax.ShapeDtypeStruct((N, H, w_cout), jnp.float32),
        grid_spec=pltpu.PrefetchScalarGridSpec(
            num_scalar_prefetch=0,
            grid=grid,
            in_specs=[
                pl.BlockSpec((bt, H, w_cin), lambda n: (n, 0, 0)),
                pl.BlockSpec((w_cin, 3 * w_cout), lambda n: (0, 0)),
                pl.BlockSpec((1, w_cout), lambda n: (0, 0)),
            ],
            out_specs=pl.BlockSpec((bt, H, w_cout), lambda n: (n, 0, 0)),
        ),
        compiler_params=pltpu.CompilerParams(
            dimension_semantics=("parallel",)),
        cost_estimate=cost,
    )(x_rows, m_cat, b_row)

    # (N, H, W*Cout) -> NCHW to match the PyTorch module output.
    return jnp.transpose(out_rows.reshape(N, H, W, Cout), (0, 3, 1, 2))


def _reference_forward(x_nchw, weight, bias):
    """Pure-JAX reference (lax conv) for correctness checks."""
    out = jax.lax.conv_general_dilated(
        x_nchw, weight, window_strides=(1, 1), padding=((1, 1), (1, 1)),
        dimension_numbers=("NCHW", "OIHW", "NCHW"))
    out = out + bias.reshape(1, -1, 1, 1)
    return jnp.where(out > 0, out, 0.2 * out)


if __name__ == "__main__":
    # ConvBlock(ndims=2, in_channels=4, out_channels=8, stride=1)
    N, Cin, Cout, H, W = 2, 4, 8, 16, 16

    key = jax.random.PRNGKey(0)
    k_x, k_w, k_b = jax.random.split(key, 3)

    x = jax.random.normal(k_x, (N, Cin, H, W), dtype=jnp.float32)
    fan_in = Cin * 3 * 3
    bound = 1.0 / (fan_in ** 0.5)
    weight = jax.random.uniform(k_w, (Cout, Cin, 3, 3), jnp.float32,
                                minval=-bound, maxval=bound)
    bias = jax.random.uniform(k_b, (Cout,), jnp.float32,
                              minval=-bound, maxval=bound)

    ref_f32 = jax.block_until_ready(_reference_forward(x, weight, bias))

    # Exact-semantics f32 path.
    out_f32 = jax.block_until_ready(
        conv_block_forward(x, weight, bias, compute_dtype=jnp.float32))
    assert out_f32.shape == (N, Cout, H, W)
    assert jnp.allclose(out_f32, ref_f32, atol=1e-4, rtol=1e-4)

    # bf16-MXU path: compare against the same bf16-rounded operands run through
    # the f32 reference (f32 accumulation on both sides).
    out_bf16 = jax.block_until_ready(
        conv_block_forward(x, weight, bias, compute_dtype=jnp.bfloat16))
    x_r = x.astype(jnp.bfloat16).astype(jnp.float32)
    w_r = weight.astype(jnp.bfloat16).astype(jnp.float32)
    ref_bf16 = jax.block_until_ready(_reference_forward(x_r, w_r, bias))
    assert jnp.allclose(out_bf16, ref_bf16, atol=1e-4, rtol=1e-4)
    # Sanity vs the full-precision module (only bf16 input quantization error).
    assert jnp.allclose(out_bf16, ref_f32, atol=5e-2, rtol=5e-2)

    print("KERNEL_OK")
</pallas_src>

<mosaic_0001>
module attributes {stable_mosaic.version = 11 : i64} {
  func.func @_conv_block_kernel(%arg0: i32, %arg1: memref<1x16x64xf32, #tpu.memory_space<vmem>>, %arg2: memref<64x384xf32, #tpu.memory_space<vmem>>, %arg3: memref<1x128xf32, #tpu.memory_space<vmem>>, %arg4: memref<1x16x128xf32, #tpu.memory_space<vmem>>) attributes {dimension_semantics = [#tpu.dimension_semantics<parallel>], iteration_bounds = array<i64: 2>, scalar_prefetch = 0 : i64, scratch_operands = 0 : i64, tpu.core_type = #tpu.core_type<tc>, window_params = [{transform_indices = @transform_0, window_bounds = array<i64: 1, 16, 64>}, {pipeline_mode = #tpu.pipeline_mode<synchronous>, transform_indices = @transform_1, window_bounds = array<i64: 64, 384>}, {pipeline_mode = #tpu.pipeline_mode<synchronous>, transform_indices = @transform_2, window_bounds = array<i64: 1, 128>}, {transform_indices = @transform_3, window_bounds = array<i64: 1, 16, 128>}]} {
    %c0 = arith.constant 0 : index
    %c0_0 = arith.constant 0 : index
    %c0_1 = arith.constant 0 : index
    %0 = vector.load %arg1[%c0, %c0_0, %c0_1] : memref<1x16x64xf32, #tpu.memory_space<vmem>>, vector<1x16x64xf32>
    %1 = vector.shape_cast %0 : vector<1x16x64xf32> to vector<16x64xf32>
    %c0_2 = arith.constant 0 : index
    %c0_3 = arith.constant 0 : index
    %2 = vector.load %arg2[%c0_2, %c0_3] : memref<64x384xf32, #tpu.memory_space<vmem>>, vector<64x384xf32>
    %cst = arith.constant dense<0.000000e+00> : vector<16x384xf32>
    %3 = tpu.matmul %1, %2, %cst {dimension_numbers = #tpu.dot_dimension_numbers<[1], [0], [0], [1], [0, 0, 1, 1], [], []>} : vector<16x64xf32>, vector<64x384xf32>, vector<16x384xf32> -> vector<16x384xf32>
    %4 = vector.extract_strided_slice %3 {offsets = [0, 0], sizes = [16, 128], strides = [1, 1]} : vector<16x384xf32> to vector<16x128xf32>
    %5 = vector.extract_strided_slice %3 {offsets = [0, 128], sizes = [16, 128], strides = [1, 1]} : vector<16x384xf32> to vector<16x128xf32>
    %6 = vector.extract_strided_slice %3 {offsets = [0, 256], sizes = [16, 128], strides = [1, 1]} : vector<16x384xf32> to vector<16x128xf32>
    %7 = tpu.iota {dimensions = array<i32: 0>} : vector<16x1xi32>
    %c16_i32 = arith.constant 16 : i32
    %c0_i32 = arith.constant 0 : i32
    %8 = arith.cmpi eq, %c16_i32, %c0_i32 : i32
    %c1_i32 = arith.constant 1 : i32
    %9 = arith.select %8, %c1_i32, %c16_i32 : i32
    %10 = vector.broadcast %9 : i32 to vector<16x1xi32>
    %11 = arith.remsi %7, %10 : vector<16x1xi32>
    %c0_i32_4 = arith.constant 0 : i32
    %12 = vector.broadcast %c0_i32_4 : i32 to vector<16x1xi32>
    %13 = arith.cmpi ne, %11, %12 : vector<16x1xi32>
    %c0_i32_5 = arith.constant 0 : i32
    %14 = vector.broadcast %c0_i32_5 : i32 to vector<16x1xi32>
    %15 = arith.cmpi slt, %11, %14 : vector<16x1xi32>
    %c0_i32_6 = arith.constant 0 : i32
    %16 = arith.cmpi slt, %9, %c0_i32_6 : i32
    %17 = vector.broadcast %16 : i1 to vector<16x1xi1>
    %18 = vector.broadcast %17 : vector<16x1xi1> to vector<16x1xi1>
    %19 = arith.xori %15, %18 : vector<16x1xi1>
    %20 = arith.andi %19, %13 : vector<16x1xi1>
    %21 = vector.broadcast %9 : i32 to vector<16x1xi32>
    %22 = arith.addi %11, %21 : vector<16x1xi32>
    %23 = arith.select %20, %22, %11 : vector<16x1xi1>, vector<16x1xi32>
    %c0_7 = arith.constant 0 : index
    %c0_8 = arith.constant 0 : index
    %24 = vector.load %arg3[%c0_7, %c0_8] : memref<1x128xf32, #tpu.memory_space<vmem>>, vector<1x128xf32>
    %25 = vector.broadcast %24 : vector<1x128xf32> to vector<16x128xf32>
    %26 = arith.addf %5, %25 : vector<16x128xf32>
    %c0_i32_9 = arith.constant 0 : i32
    %27 = vector.broadcast %c0_i32_9 : i32 to vector<16x1xi32>
    %28 = arith.cmpi eq, %23, %27 : vector<16x1xi32>
    %c1_i32_10 = arith.constant 1 : i32
    %29 = tpu.dynamic_rotate %4 by %c1_i32_10 dim 0 : vector<16x128xf32>, i32 -> vector<16x128xf32>
    %cst_11 = arith.constant 0.000000e+00 : f32
    %30 = vector.shape_cast %28 : vector<16x1xi1> to vector<16x1xi1>
    %31 = vector.broadcast %30 : vector<16x1xi1> to vector<16x128xi1>
    %32 = vector.broadcast %cst_11 : f32 to vector<16x128xf32>
    %33 = arith.select %31, %32, %29 : vector<16x128xi1>, vector<16x128xf32>
    %34 = arith.addf %26, %33 : vector<16x128xf32>
    %c15_i32 = arith.constant 15 : i32
    %35 = vector.broadcast %c15_i32 : i32 to vector<16x1xi32>
    %36 = arith.cmpi eq, %23, %35 : vector<16x1xi32>
    %c15_i32_12 = arith.constant 15 : i32
    %37 = tpu.dynamic_rotate %6 by %c15_i32_12 dim 0 : vector<16x128xf32>, i32 -> vector<16x128xf32>
    %cst_13 = arith.constant 0.000000e+00 : f32
    %38 = vector.shape_cast %36 : vector<16x1xi1> to vector<16x1xi1>
    %39 = vector.broadcast %38 : vector<16x1xi1> to vector<16x128xi1>
    %40 = vector.broadcast %cst_13 : f32 to vector<16x128xf32>
    %41 = arith.select %39, %40, %37 : vector<16x128xi1>, vector<16x128xf32>
    %42 = arith.addf %34, %41 : vector<16x128xf32>
    %cst_14 = arith.constant 2.000000e-01 : f32
    %43 = vector.broadcast %cst_14 : f32 to vector<16x128xf32>
    %44 = arith.mulf %43, %42 : vector<16x128xf32>
    %45 = arith.maximumf %42, %44 : vector<16x128xf32>
    %46 = vector.shape_cast %45 : vector<16x128xf32> to vector<1x16x128xf32>
    %c0_15 = arith.constant 0 : index
    %c0_16 = arith.constant 0 : index
    %c0_17 = arith.constant 0 : index
    %47 = vector.load %arg4[%c0_15, %c0_16, %c0_17] : memref<1x16x128xf32, #tpu.memory_space<vmem>>, vector<1x16x128xf32>
    tpu.vector_store %arg4[%c0_15, %c0_16, %c0_17], %46 {strides = array<i32>} : memref<1x16x128xf32, #tpu.memory_space<vmem>>, vector<1x16x128xf32>,
    return
  }
  func.func @transform_0(%arg0: i32) -> (i32, i32, i32) {
    %c0_i32 = arith.constant 0 : i32
    %c0_i32_0 = arith.constant 0 : i32
    %c0_i32_1 = arith.constant 0 : i32
    return %arg0, %c0_i32, %c0_i32_0 : i32, i32, i32
  }
  func.func @transform_1(%arg0: i32) -> (i32, i32) {
    %c0_i32 = arith.constant 0 : i32
    %c0_i32_0 = arith.constant 0 : i32
    %c0_i32_1 = arith.constant 0 : i32
    return %c0_i32, %c0_i32_0 : i32, i32
  }
  func.func @transform_2(%arg0: i32) -> (i32, i32) {
    %c0_i32 = arith.constant 0 : i32
    %c0_i32_0 = arith.constant 0 : i32
    %c0_i32_1 = arith.constant 0 : i32
    return %c0_i32, %c0_i32_0 : i32, i32
  }
  func.func @transform_3(%arg0: i32) -> (i32, i32, i32) {
    %c0_i32 = arith.constant 0 : i32
    %c0_i32_0 = arith.constant 0 : i32
    %c0_i32_1 = arith.constant 0 : i32
    return %arg0, %c0_i32, %c0_i32_0 : i32, i32, i32
  }
}

</mosaic_0001>

<llo_original>
// kernel: tile.8
$region0: #{tile.8}
  #allocation0 [shape = 's32[1]{0}', space=sflag, size = 0x4, scoped, tag = 'scoped memory for tile.8']
  %s0 = inlined_call_operand.vmem [shape: f32[8], index: 0, kind: input, shape index: {}]
  %s1 = inlined_call_operand.vmem [shape: f32[16,8], index: 1, kind: output, shape index: {}]
  // Predicated region
  $region2: #{tile.8} parent=0 // pred_check
    _
  $region3: #{tile.8} parent=0 // pred_check_branch
    %3 = sbr.rel (0) target = $region5
  $region4: #{tile.8} parent=0 // pred_region
    _
  $region5: #{tile.8} parent=0 // pred_fallthru
    _
  %v4 = vld [vmem:[%s0] ss:$0 sm:$0xff]
  %5 = vst [vmem:[%s1] sm:$0xff] %v4
  %s6 = scalar_lea.vmem %s1, 8
  %7 = vst [vmem:[%s6] sm:$0xff] %v4

// kernel: tile.9
$region0: #{tile.9}
  %s0 = inlined_call_operand.vmem [shape: f32[16,8], index: 0, kind: input, shape index: {}]
  %s1 = inlined_call_operand.vmem [shape: f32[1,128], index: 1, kind: output, shape index: {}]
  $region1: #{tile.9} parent=0
    #allocation0 [shape = 'u8[4096]{0}', space=vmem, size = 0x1000, scoped, tag = 'scoped mem for output reshape']
    %v2 = vld [vmem:[%s0] sm:$0x1]
    %vm3 = vcmask 64512
    %4 = vst.msk [vmem:[#allocation0] sm:$0x1] %vm3, %v2
    %s5 = scalar_lea.vmem %s0, 15
    %v6 = vld [vmem:[%s5] sm:$0x1]
    %7 = vrot.lane.b32.xlu0 %v6, 120
    %v8 = vpop.permute.xlu0 %7
    %vm9 = vcmask 1048512
    %10 = vst.msk [vmem:[#allocation0] sm:$0x1] %vm9, %v8
    %s11 = scalar_lea.vmem %s0, 14
    %v12 = vld [vmem:[%s11] sm:$0x1]
    %13 = vrot.lane.b32.xlu0 %v12, 112
    %v14 = vpop.permute.xlu0 %13
    %vm15 = vcmask 982912
    %16 = vst.msk [vmem:[#allocation0] sm:$0x1] %vm15, %v14
    %s17 = scalar_lea.vmem %s0, 13
    %v18 = vld [vmem:[%s17] sm:$0x1]
    %19 = vrot.lane.b32.xlu0 %v18, 104
    %v20 = vpop.permute.xlu0 %19
    %vm21 = vcmask 917312
    %22 = vst.msk [vmem:[#allocation0] sm:$0x1] %vm21, %v20
    %s23 = scalar_lea.vmem %s0, 12
    %v24 = vld [vmem:[%s23] sm:$0x1]
    %25 = vrot.lane.b32.xlu0 %v24, 96
    %v26 = vpop.permute.xlu0 %25
    %vm27 = vcmask 851712
    %28 = vst.msk [vmem:[#allocation0] sm:$0x1] %vm27, %v26
    %s29 = scalar_lea.vmem %s0, 11
    %v30 = vld [vmem:[%s29] sm:$0x1]
    %31 = vrot.lane.b32.xlu0 %v30, 88
    %v32 = vpop.permute.xlu0 %31
    %vm33 = vcmask 786112
    %34 = vst.msk [vmem:[#allocation0] sm:$0x1] %vm33, %v32
    %s35 = scalar_lea.vmem %s0, 10
    %v36 = vld [vmem:[%s35] sm:$0x1]
    %37 = vrot.lane.b32.xlu0 %v36, 80
    %v38 = vpop.permute.xlu0 %37
    %vm39 = vcmask 720512
    %40 = vst.msk [vmem:[#allocation0] sm:$0x1] %vm39, %v38
    %s41 = scalar_lea.vmem %s0, 9
    %v42 = vld [vmem:[%s41] sm:$0x1]
    %43 = vrot.lane.b32.xlu0 %v42, 72
    %v44 = vpop.permute.xlu0 %43
    %vm45 = vcmask 654912
    %46 = vst.msk [vmem:[#allocation0] sm:$0x1] %vm45, %v44
    %s47 = scalar_lea.vmem %s0, 8
    %v48 = vld [vmem:[%s47] sm:$0x1]
    %49 = vrot.lane.b32.xlu0 %v48, 64
    %v50 = vpop.permute.xlu0 %49
    %vm51 = vcmask 589312
    %52 = vst.msk [vmem:[#allocation0] sm:$0x1] %vm51, %v50
    %s53 = scalar_lea.vmem %s0, 7
    %v54 = vld [vmem:[%s53] sm:$0x1]
    %55 = vrot.lane.b32.xlu0 %v54, 56
    %v56 = vpop.permute.xlu0 %55
    %vm57 = vcmask 523712
    %58 = vst.msk [vmem:[#allocation0] sm:$0x1] %vm57, %v56
    %s59 = scalar_lea.vmem %s0, 6
    %v60 = vld [vmem:[%s59] sm:$0x1]
    %61 = vrot.lane.b32.xlu0 %v60, 48
    %v62 = vpop.permute.xlu0 %61
    %vm63 = vcmask 458112
    %64 = vst.msk [vmem:[#allocation0] sm:$0x1] %vm63, %v62
    %s65 = scalar_lea.vmem %s0, 5
    %v66 = vld [vmem:[%s65] sm:$0x1]
    %67 = vrot.lane.b32.xlu0 %v66, 40
    %v68 = vpop.permute.xlu0 %67
    %vm69 = vcmask 392512
    %70 = vst.msk [vmem:[#allocation0] sm:$0x1] %vm69, %v68
    %s71 = scalar_lea.vmem %s0, 4
    %v72 = vld [vmem:[%s71] sm:$0x1]
    %73 = vrot.lane.b32.xlu0 %v72, 32
    %v74 = vpop.permute.xlu0 %73
    %vm75 = vcmask 326912
    %76 = vst.msk [vmem:[#allocation0] sm:$0x1] %vm75, %v74
    %s77 = scalar_lea.vmem %s0, 3
    %v78 = vld [vmem:[%s77] sm:$0x1]
    %79 = vrot.lane.b32.xlu0 %v78, 24
    %v80 = vpop.permute.xlu0 %79
    %vm81 = vcmask 261312
    %82 = vst.msk [vmem:[#allocation0] sm:$0x1] %vm81, %v80
    %s83 = scalar_lea.vmem %s0, 2
    %v84 = vld [vmem:[%s83] sm:$0x1]
    %85 = vrot.lane.b32.xlu0 %v84, 16
    %v86 = vpop.permute.xlu0 %85
    %vm87 = vcmask 195712
    %88 = vst.msk [vmem:[#allocation0] sm:$0x1] %vm87, %v86
    %s89 = scalar_lea.vmem %s0, 1
    %v90 = vld [vmem:[%s89] sm:$0x1]
    %91 = vrot.lane.b32.xlu0 %v90, 8
    %v92 = vpop.permute.xlu0 %91
    %vm93 = vcmask 130112
    %94 = vst.msk [vmem:[#allocation0] sm:$0x1] %vm93, %v92
    %s96 = sshllo.u32 0, 1
    %v98 = vld [vmem:[#allocation0] sm:%s96]
    %s99 = sshllo.u32 0, 1
    %100 = vst [vmem:[%s1] sm:%s99] %v98

// kernel: conv_block_forward.1
$region0: #{conv_block_forward.1}
  #allocation0 [shape = 'u32[]', space=smem, size = 0x4, offset = 0x4, fixed_abs, tag = 'smem constant byte address 0x4 - core index']
  #allocation1 [shape = 'u32[144,128]{1,0:T(1,128)}', space=vmem, size = 0x12000, scoped, tag = 'internal scratch']
  %s0 = inlined_call_operand.vmem [shape: f32[2,16,64], index: 0, kind: input, shape index: {}]
  %s1 = inlined_call_operand.vmem [shape: f32[64,384], index: 1, kind: input, shape index: {}]
  %s2 = inlined_call_operand.vmem [shape: f32[1,128], index: 2, kind: input, shape index: {}]
  %s3 = inlined_call_operand.vmem [shape: f32[2,16,128], index: 3, kind: output, shape index: {}]
  %s4 = sld [smem:[#allocation0]]
  $region45: #{conv_block_forward.1} parent=0
    _
  %s6 = ssub.s32 1, %s4
  %s7 = scalar_select 0, %s6, %s4
  loop: start=0, step=1, limit=4
  $region2: #{conv_block_forward.1} parent=0 // loop_pre_header
    _
  $region3: #{conv_block_forward.1} parent=0 // loop_header
    %s9 = sphi 0, %s13
    %p10 = scmp.ge.s32.totalorder %s9, 4
    %s19 = sphi 0, %s21
    %s22 = sphi 0, %s19
    %s23 = sphi 0, %s22
    %s39 = sphi 0, %s23
    %s43 = sphi 0, %s43
    %s45 = sphi 0, %s43
    %s46 = sphi 0, %s45
    %s60 = sphi 0, %s46
    %s64 = sphi 0, %s64
    %s66 = sphi 0, %s64
    %s67 = sphi 0, %s66
    %s81 = sphi 0, %s67
    %s87 = sphi 0, %s89
    %s90 = sphi 0, %s87
    %s91 = sphi 0, %s90
    %s107 = sphi 0, %s91
  $region4: #{conv_block_forward.1} parent=0 // loop_header_branch
    %12 = sbr.rel (%p10) target = $region8
  $region5: #{conv_block_forward.1} parent=0 // loop_body
    %s14 = ssub.s32 %s9, 1
    %s15 = ssub.s32 %s9, 2
    %s16 = sadd.s32 %s9, 1
    %s17 = ssub.s32 %s9, %s16
    %p18 = scmp.eq.s32.totalorder %s17, 0
    %s20 = sadd.s32 %s19, 1
    %s21 = scalar_select %p18, %s19, %s20
    %p24 = pneg %p18
    %p25 = scmp.eq.s32.totalorder %s9, 1
    %p26 = por %p24, %p25
    %p27 = scmp.ne.s32.totalorder %s19, %s22
    %p28 = scmp.eq.s32.totalorder %s9, 0
    %p29 = por %p27, %p28
    %p30 = scmp.ne.s32.totalorder %s19, %s22
    %p31 = scmp.eq.s32.totalorder %s14, 1
    %p32 = por %p30, %p31
    %p33 = scmp.ne.s32.totalorder %s22, %s23
    %p34 = scmp.eq.s32.totalorder %s14, 0
    %p35 = por %p33, %p34
    %p36 = scmp.ne.s32.totalorder %s22, %s23
    %p37 = scmp.eq.s32.totalorder %s15, 1
    %p38 = por %p36, %p37
    %p40 = scmp.ne.s32.totalorder %s23, %s39
    %p41 = scmp.eq.s32.totalorder %s15, 0
    %p42 = por %p40, %p41
    %s44 = sadd.s32 %s43, 1
    %p47 = scmp.eq.s32.totalorder %s9, 1
    %p48 = scmp.ne.s32.totalorder %s43, %s45
    %p49 = scmp.eq.s32.totalorder %s9, 0
    %p50 = por %p48, %p49
    %p51 = scmp.ne.s32.totalorder %s43, %s45
    %p52 = scmp.eq.s32.totalorder %s14, 1
    %p53 = por %p51, %p52
    %p54 = scmp.ne.s32.totalorder %s45, %s46
    %p55 = scmp.eq.s32.totalorder %s14, 0
    %p56 = por %p54, %p55
    %p57 = scmp.ne.s32.totalorder %s45, %s46
    %p58 = scmp.eq.s32.totalorder %s15, 1
    %p59 = por %p57, %p58
    %p61 = scmp.ne.s32.totalorder %s46, %s60
    %p62 = scmp.eq.s32.totalorder %s15, 0
    %p63 = por %p61, %p62
    %s65 = sadd.s32 %s64, 1
    %p68 = scmp.eq.s32.totalorder %s9, 1
    %p69 = scmp.ne.s32.totalorder %s64, %s66
    %p70 = scmp.eq.s32.totalorder %s9, 0
    %p71 = por %p69, %p70
    %p72 = scmp.ne.s32.totalorder %s64, %s66
    %p73 = scmp.eq.s32.totalorder %s14, 1
    %p74 = por %p72, %p73
    %p75 = scmp.ne.s32.totalorder %s66, %s67
    %p76 = scmp.eq.s32.totalorder %s14, 0
    %p77 = por %p75, %p76
    %p78 = scmp.ne.s32.totalorder %s66, %s67
    %p79 = scmp.eq.s32.totalorder %s15, 1
    %p80 = por %p78, %p79
    %p82 = scmp.ne.s32.totalorder %s67, %s81
    %p83 = scmp.eq.s32.totalorder %s15, 0
    %p84 = por %p82, %p83
    %s85 = ssub.s32 %s9, %s16
    %p86 = scmp.eq.s32.totalorder %s85, 0
    %s88 = sadd.s32 %s87, 1
    %s89 = scalar_select %p86, %s87, %s88
    %p92 = pneg %p86
    %p93 = scmp.eq.s32.totalorder %s9, 1
    %p94 = por %p92, %p93
    %p95 = scmp.ne.s32.totalorder %s87, %s90
    %p96 = scmp.eq.s32.totalorder %s9, 0
    %p97 = por %p95, %p96
    %p98 = scmp.ne.s32.totalorder %s87, %s90
    %p99 = scmp.eq.s32.totalorder %s14, 1
    %p100 = por %p98, %p99
    %p101 = scmp.ne.s32.totalorder %s90, %s91
    %p102 = scmp.eq.s32.totalorder %s14, 0
    %p103 = por %p101, %p102
    %p104 = scmp.ne.s32.totalorder %s90, %s91
    %p105 = scmp.eq.s32.totalorder %s15, 1
    %p106 = por %p104, %p105
    %p108 = scmp.ne.s32.totalorder %s91, %s107
    %p109 = scmp.eq.s32.totalorder %s15, 0
    %p110 = por %p108, %p109
    %p111 = scmp.le.s32.totalorder 1, %s9
    %p112 = scmp.lt.s32.totalorder %s9, 3
    %p113 = pnand %p111, %p112
    %p114 = pneg %p113
    // Predicated region
    $region9: #{conv_block_forward.1} parent=5 // pred_check
      _
    $region10: #{conv_block_forward.1} parent=5 // pred_check_branch
      %116 = sbr.rel (%p113) target = $region12
    $region11: #{conv_block_forward.1} parent=5 // pred_region
      %s117 = ssub.s32 %s9, 1
      // Predicated region
      $region13: #{conv_block_forward.1} parent=11 // pred_check
        %p118 = pneg %p56
      $region14: #{conv_block_forward.1} parent=11 // pred_check_branch
        %120 = sbr.rel (%p118) target = $region16
      $region15: #{conv_block_forward.1} parent=11 // pred_region
        _
      $region16: #{conv_block_forward.1} parent=11 // pred_fallthru
        _
      // Predicated region
      $region17: #{conv_block_forward.1} parent=11 // pred_check
        %p121 = pneg %p77
      $region18: #{conv_block_forward.1} parent=11 // pred_check_branch
        %123 = sbr.rel (%p121) target = $region20
      $region19: #{conv_block_forward.1} parent=11 // pred_region
        _
      $region20: #{conv_block_forward.1} parent=11 // pred_fallthru
        _
    $region12: #{conv_block_forward.1} parent=5 // pred_fallthru
      _
    %p124 = scmp.lt.s32.totalorder %s9, 2
    // Predicated region
    $region21: #{conv_block_forward.1} parent=5 // pred_check
      %p125 = pneg %p124
    $region22: #{conv_block_forward.1} parent=5 // pred_check_branch
      %127 = sbr.rel (%p125) target = $region24
    $region23: #{conv_block_forward.1} parent=5 // pred_region
      // Predicated region
      $region25: #{conv_block_forward.1} parent=23 // pred_check
        %p128 = pneg %p29
      $region26: #{conv_block_forward.1} parent=23 // pred_check_branch
        %130 = sbr.rel (%p128) target = $region28
      $region27: #{conv_block_forward.1} parent=23 // pred_region
        %p131 = scmp.lt.s32.totalorder %s9, 1
        %s132 = scalar_select %p131, %s9, 1
        %s133 = smul.addr %s132, 2
        %s134 = smul.addr %s133, 8
        %s135 = scalar_lea.vmem %s0, %s134
      $region28: #{conv_block_forward.1} parent=23 // pred_fallthru
        _
    $region24: #{conv_block_forward.1} parent=5 // pred_fallthru
      _
    %p136 = scmp.le.s32.totalorder 1, %s9
    %p137 = scmp.lt.s32.totalorder %s9, 3
    %p138 = pnand %p136, %p137
    %p139 = pneg %p138
    // Predicated region
    $region29: #{conv_block_forward.1} parent=5 // pred_check
      _
    $region30: #{conv_block_forward.1} parent=5 // pred_check_branch
      %141 = sbr.rel (%p138) target = $region32
    $region31: #{conv_block_forward.1} parent=5 // pred_region
      %s142 = ssub.s32 %s9, 1
      %p143 = scmp.lt.s32.totalorder %s14, 1
      %s144 = scalar_select %p143, %s14, 1
      %s145 = smul.addr %s144, 2
      %s146 = smul.addr %s145, 8
      %s147 = scalar_lea.vmem %s0, %s146
      %p148 = pneg %p35
      %p149 = pneg %p32
      %p150 = pneg %p56
      %p151 = pneg %p53
      %p152 = pneg %p77
      %p153 = pneg %p74
      %p154 = pneg %p103
      %p155 = pneg %p100
      %p156 = scmp.lt.s32.totalorder %s14, 1
      %s157 = scalar_select %p156, %s14, 1
      %s158 = smul.addr %s157, 2
      %s159 = smul.addr %s158, 8
      %s160 = scalar_lea.vmem %s3, %s159
      %p161 = scmp.lt.s32.totalorder %s14, 1
      %s162 = scalar_select %p161, %s14, 1
      %s163 = smul.addr %s162, 2
      %s164 = smul.addr %s163, 8
      %s165 = scalar_lea.vmem %s0, %s164
      %p166 = scmp.lt.s32.totalorder %s14, 1
      %s167 = scalar_select %p166, %s14, 1
      %s168 = smul.addr %s167, 2
      %s169 = smul.addr %s168, 8
      %s170 = scalar_lea.vmem %s3, %s169
      %v171 = vld [vmem:[%s165] sm:$0xff]
      %v172 = vld [vmem:[%s165 + $0x8] sm:$0xff]
      %v173 = vld [vmem:[%s1] sm:$0xff]
      %v174 = vld [vmem:[%s1 + $0x8] sm:$0xff]
      %v175 = vld [vmem:[%s1 + $0x10] sm:$0xff]
      %v176 = vld [vmem:[%s1 + $0x18] sm:$0xff]
      %v177 = vld [vmem:[%s1 + $0x20] sm:$0xff]
      %v178 = vld [vmem:[%s1 + $0x28] sm:$0xff]
      %v179 = vld [vmem:[%s1 + $0x30] sm:$0xff]
      %v180 = vld [vmem:[%s1 + $0x38] sm:$0xff]
      %v181 = vld [vmem:[%s1 + $0x40] sm:$0xff]
      %v182 = vld [vmem:[%s1 + $0x48] sm:$0xff]
      %v183 = vld [vmem:[%s1 + $0x50] sm:$0xff]
      %v184 = vld [vmem:[%s1 + $0x58] sm:$0xff]
      %v185 = vld [vmem:[%s1 + $0x60] sm:$0xff]
      %v186 = vld [vmem:[%s1 + $0x68] sm:$0xff]
      %v187 = vld [vmem:[%s1 + $0x70] sm:$0xff]
      %v188 = vld [vmem:[%s1 + $0x78] sm:$0xff]
      %v189 = vld [vmem:[%s1 + $0x80] sm:$0xff]
      %v190 = vld [vmem:[%s1 + $0x88] sm:$0xff]
      %v191 = vld [vmem:[%s1 + $0x90] sm:$0xff]
      %v192 = vld [vmem:[%s1 + $0x98] sm:$0xff]
      %v193 = vld [vmem:[%s1 + $0xa0] sm:$0xff]
      %v194 = vld [vmem:[%s1 + $0xa8] sm:$0xff]
      %v195 = vld [vmem:[%s1 + $0xb0] sm:$0xff]
      %v196 = vld [vmem:[%s1 + $0xb8] sm:$0xff]
      %vm197 = vcmask 523264
      %v199 = vsel %vm197, %v171, 0
      %v202 = vsel %vm197, %v172, 0
      %204 = vmatprep.subr.mxu0 %v174
      %205 = vmatpush1.msra.mxu0 %v173
      %206 = vmatprep.subr.mxu0 %v177
      %207 = vmatpush1.msra.mxu0 %v176
      %208 = vmatprep.subr.mxu0 %v180
      %209 = vmatpush1.msra.mxu0 %v179
      %210 = vmatprep.subr.mxu0 %v183
      %211 = vmatpush1.msra.mxu0 %v182
      %212 = vmatprep.subr.mxu0 %v186
      %213 = vmatpush1.msra.mxu0 %v185
      %214 = vmatprep.subr.mxu0 %v189
      %215 = vmatpush1.msra.mxu0 %v188
      %216 = vmatprep.subr.mxu0 %v192
      %217 = vmatpush1.msra.mxu0 %v191
      %218 = vmatprep.subr.mxu0 %v195
      %219 = vmatpush1.msra.mxu0 %v194
      %220 = vmatprep.subr.mxu0 0.0
      %221 = vmatpush1.msra.mxu0 0.0
      %222 = vmatprep.subr.mxu0 0.0
      %223 = vmatpush1.msra.mxu0 0.0
      %224 = vmatprep.subr.mxu0 0.0
      %225 = vmatpush1.msra.mxu0 0.0
      %226 = vmatprep.subr.mxu0 0.0
      %227 = vmatpush1.msra.mxu0 0.0
      %228 = vmatprep.subr.mxu0 0.0
      %229 = vmatpush1.msra.mxu0 0.0
      %230 = vmatprep.subr.mxu0 0.0
      %231 = vmatpush1.msra.mxu0 0.0
      %232 = vmatprep.subr.mxu0 0.0
      %233 = vmatpush1.msra.mxu0 0.0
      %234 = vmatprep.subr.mxu0 0.0
      %235 = vmatpush1.msra.mxu0 0.0
      %236 = vmatprep.subr.mxu0 0.0
      %237 = vmatpush1.msra.mxu0 0.0
      %238 = vmatprep.subr.mxu0 0.0
      %239 = vmatpush1.msra.mxu0 0.0
      %240 = vmatprep.subr.mxu0 0.0
      %241 = vmatpush1.msra.mxu0 0.0
      %242 = vmatprep.subr.mxu0 0.0
      %243 = vmatpush1.msra.mxu0 0.0
      %244 = vmatprep.subr.mxu0 0.0
      %245 = vmatpush1.msra.mxu0 0.0
      %246 = vmatprep.subr.mxu0 0.0
      %247 = vmatpush1.msra.mxu0 0.0
      %248 = vmatprep.subr.mxu0 0.0
      %249 = vmatpush1.msra.mxu0 0.0
      %250 = vmatprep.subr.mxu0 0.0
      %251 = vmatpush1.msra.mxu0 0.0
      %252 = vmatprep.subr.mxu0 0.0
      %253 = vmatpush1.msra.mxu0 0.0
      %254 = vmatprep.subr.mxu0 0.0
      %255 = vmatpush1.msra.mxu0 0.0
      %256 = vmatprep.subr.mxu0 0.0
      %257 = vmatpush1.msra.mxu0 0.0
      %258 = vmatprep.subr.mxu0 0.0
      %259 = vmatpush1.msra.mxu0 0.0
      %260 = vmatprep.subr.mxu0 0.0
      %261 = vmatpush1.msra.mxu0 0.0
      %262 = vmatprep.subr.mxu0 0.0
      %263 = vmatpush1.msra.mxu0 0.0
      %264 = vmatprep.subr.mxu0 0.0
      %265 = vmatpush1.msra.mxu0 0.0
      %266 = vmatprep.subr.mxu0 0.0
      %267 = vmatpush1.msra.mxu0 0.0
      %268 = vmatprep.mubr.f32.mxu0 0.0
      %269 = vmatmul.mubr.f32.gmra.mrb[0].mxu0 %v199
      %v270 = vpop.f32.mrb[0].mxu0
      %v271 = vadd.f32 0.0, %v270
      %v272 = vpop.f32.mrb[0].mxu0
      %v273 = vadd.f32 0.0, %v272
      %274 = vmatprep.mubr.f32.mxu0 0.0
      %275 = vmatmul.mubr.f32.gmra.mrb[0].mxu0 %v202
      %v276 = vpop.f32.mrb[0].mxu0
      %v277 = vadd.f32 0.0, %v276
      %v278 = vpop.f32.mrb[0].mxu0
      %v279 = vadd.f32 0.0, %v278
      %280 = vdwg.mxu0
      %281 = vmatprep.subr.mxu0 0.0
      %282 = vmatpush1.msra.mxu0 %v175
      %283 = vmatprep.subr.mxu0 0.0
      %284 = vmatpush1.msra.mxu0 %v178
      %285 = vmatprep.subr.mxu0 0.0
      %286 = vmatpush1.msra.mxu0 %v181
      %287 = vmatprep.subr.mxu0 0.0
      %288 = vmatpush1.msra.mxu0 %v184
      %289 = vmatprep.subr.mxu0 0.0
      %290 = vmatpush1.msra.mxu0 %v187
      %291 = vmatprep.subr.mxu0 0.0
      %292 = vmatpush1.msra.mxu0 %v190
      %293 = vmatprep.subr.mxu0 0.0
      %294 = vmatpush1.msra.mxu0 %v193
      %295 = vmatprep.subr.mxu0 0.0
      %296 = vmatpush1.msra.mxu0 %v196
      %297 = vmatprep.subr.mxu0 0.0
      %298 = vmatpush1.msra.mxu0 0.0
      %299 = vmatprep.subr.mxu0 0.0
      %300 = vmatpush1.msra.mxu0 0.0
      %301 = vmatprep.subr.mxu0 0.0
      %302 = vmatpush1.msra.mxu0 0.0
      %303 = vmatprep.subr.mxu0 0.0
      %304 = vmatpush1.msra.mxu0 0.0
      %305 = vmatprep.subr.mxu0 0.0
      %306 = vmatpush1.msra.mxu0 0.0
      %307 = vmatprep.subr.mxu0 0.0
      %308 = vmatpush1.msra.mxu0 0.0
      %309 = vmatprep.subr.mxu0 0.0
      %310 = vmatpush1.msra.mxu0 0.0
      %311 = vmatprep.subr.mxu0 0.0
      %312 = vmatpush1.msra.mxu0 0.0
      %313 = vmatprep.subr.mxu0 0.0
      %314 = vmatpush1.msra.mxu0 0.0
      %315 = vmatprep.subr.mxu0 0.0
      %316 = vmatpush1.msra.mxu0 0.0
      %317 = vmatprep.subr.mxu0 0.0
      %318 = vmatpush1.msra.mxu0 0.0
      %319 = vmatprep.subr.mxu0 0.0
      %320 = vmatpush1.msra.mxu0 0.0
      %321 = vmatprep.subr.mxu0 0.0
      %322 = vmatpush1.msra.mxu0 0.0
      %323 = vmatprep.subr.mxu0 0.0
      %324 = vmatpush1.msra.mxu0 0.0
      %325 = vmatprep.subr.mxu0 0.0
      %326 = vmatpush1.msra.mxu0 0.0
      %327 = vmatprep.subr.mxu0 0.0
      %328 = vmatpush1.msra.mxu0 0.0
      %329 = vmatprep.subr.mxu0 0.0
      %330 = vmatpush1.msra.mxu0 0.0
      %331 = vmatprep.subr.mxu0 0.0
      %332 = vmatpush1.msra.mxu0 0.0
      %333 = vmatprep.subr.mxu0 0.0
      %334 = vmatpush1.msra.mxu0 0.0
      %335 = vmatprep.subr.mxu0 0.0
      %336 = vmatpush1.msra.mxu0 0.0
      %337 = vmatprep.subr.mxu0 0.0
      %338 = vmatpush1.msra.mxu0 0.0
      %339 = vmatprep.subr.mxu0 0.0
      %340 = vmatpush1.msra.mxu0 0.0
      %341 = vmatprep.subr.mxu0 0.0
      %342 = vmatpush1.msra.mxu0 0.0
      %343 = vmatprep.subr.mxu0 0.0
      %344 = vmatpush1.msra.mxu0 0.0
      %345 = vmatprep.mubr.f32.mxu0 0.0
      %346 = vmatmul.mubr.f32.gmra.mrb[0].mxu0 %v199
      %v347 = vpop.f32.mrb[0].mxu0
      %v348 = vadd.f32 0.0, %v347
      %v349 = vpop.f32.mrb[0].mxu0
      %350 = vmatprep.mubr.f32.mxu0 0.0
      %351 = vmatmul.mubr.f32.gmra.mrb[0].mxu0 %v202
      %v352 = vpop.f32.mrb[0].mxu0
      %v353 = vadd.f32 0.0, %v352
      %v354 = vpop.f32.mrb[0].mxu0
      %355 = vdwg.mxu0
      %v356 = vlaneseq
      %v357 = vshrl.u32 %v356, 7
      %v358 = vadd.s32 %v357, 8
      %vm359 = vcmp.lt.s32.totalorder %v357, 0
      %v360 = vsub.s32 0, %v357
      %v361 = vsel %vm359, %v360, %v357
      %v362 = vshrl.u32 %v361, 4
      %v363 = vand.u32 %v361, 15
      %v364 = vsub.s32 0, %v363
      %v365 = vsel %vm359, %v364, %v363
      %vm366 = vcmp.lt.s32.totalorder %v358, 0
      %v367 = vsub.s32 0, %v358
      %v368 = vsel %vm366, %v367, %v358
      %v369 = vshrl.u32 %v368, 4
      %v370 = vand.u32 %v368, 15
      %v371 = vsub.s32 0, %v370
      %v372 = vsel %vm366, %v371, %v370
      %vm373 = vcmp.ne.s32.totalorder %v365, 0
      %vm374 = vcmp.ne.s32.totalorder %v372, 0
      %vm375 = vcmp.lt.s32.totalorder %v365, 0
      %vm376 = vcmp.lt.s32.totalorder %v372, 0
      %vm377 = vmand %vm375, %vm373
      %vm378 = vmand %vm376, %vm374
      %v379 = vadd.s32 %v365, 16
      %v380 = vadd.s32 %v372, 16
      %v381 = vsel %vm377, %v379, %v365
      %v382 = vsel %vm378, %v380, %v372
      %v383 = vld [vmem:[%s2] sm:$0x1]
      %v385 = vlaneseq
      %v386 = vshrl.u32 %v385, 7
      %v387 = vsub.s32 0, %v386
      %v388 = vrot.slane %v383, %v387
      %v390 = vadd.f32 %v273, %v388
      %v391 = vadd.f32 %v279, %v388
      %vm392 = vcmp.eq.s32.totalorder %v381, 0
      %vm393 = vcmp.eq.s32.totalorder %v382, 0
      %v394 = vrot.slane %v271, 7
      %v395 = vrot.slane %v277, 7
      %vm396 = vcmp.lt.s32.totalorder %v357, 1
      %v397 = vsel %vm396, %v394, %v395
      %v398 = vsel %vm396, %v395, %v394
      %v399 = vsel %vm392, 1, 0
      %v400 = vsel %vm393, 1, 0
      %vm401 = vcmp.eq.s32.totalorder %v399, 1
      %vm402 = vcmp.eq.s32.totalorder %v400, 1
      %v403 = vsel %vm401, 0.0, %v398
      %v404 = vsel %vm402, 0.0, %v397
      %v405 = vadd.f32 %v390, %v403
      %v406 = vadd.f32 %v391, %v404
      %vm407 = vcmp.eq.s32.totalorder %v381, 15
      %vm408 = vcmp.eq.s32.totalorder %v382, 15
      %v409 = vrot.slane %v348, 1
      %v410 = vrot.slane %v353, 1
      %vm411 = vcmp.lt.s32.totalorder %v357, 7
      %v412 = vsel %vm411, %v409, %v410
      %v413 = vsel %vm411, %v410, %v409
      %v414 = vsel %vm407, 1, 0
      %v415 = vsel %vm408, 1, 0
      %vm416 = vcmp.eq.s32.totalorder %v414, 1
      %vm417 = vcmp.eq.s32.totalorder %v415, 1
      %v418 = vsel %vm416, 0.0, %v412
      %v419 = vsel %vm417, 0.0, %v413
      %v420 = vadd.f32 %v405, %v418
      %v421 = vadd.f32 %v406, %v419
      %v422 = vmul.f32 %v420, 0.2
      %v423 = vmul.f32 %v421, 0.2
      %v424 = vmax.f32 %v420, %v422
      %v425 = vmax.f32 %v421, %v423
      %426 = vst [vmem:[%s170] sm:$0xff] %v424
      %427 = vst [vmem:[%s170 + $0x8] sm:$0xff] %v425
      %p428 = scmp.lt.s32.totalorder %s14, 1
      %s429 = scalar_select %p428, %s14, 1
      %s430 = smul.addr %s429, 2
      %s431 = smul.addr %s430, 8
      %s432 = scalar_lea.vmem %s3, %s431
      // Predicated region
      $region33: #{conv_block_forward.1} parent=31 // pred_check
        %p433 = pneg %p100
      $region34: #{conv_block_forward.1} parent=31 // pred_check_branch
        %435 = sbr.rel (%p433) target = $region36
      $region35: #{conv_block_forward.1} parent=31 // pred_region
        _
      $region36: #{conv_block_forward.1} parent=31 // pred_fallthru
        _
    $region32: #{conv_block_forward.1} parent=5 // pred_fallthru
      _
    %p436 = scmp.le.s32.totalorder 2, %s9
    // Predicated region
    $region37: #{conv_block_forward.1} parent=5 // pred_check
      %p437 = pneg %p436
    $region38: #{conv_block_forward.1} parent=5 // pred_check_branch
      %439 = sbr.rel (%p437) target = $region40
    $region39: #{conv_block_forward.1} parent=5 // pred_region
      %s440 = ssub.s32 %s9, 2
      // Predicated region
      $region41: #{conv_block_forward.1} parent=39 // pred_check
        %p441 = pneg %p106
      $region42: #{conv_block_forward.1} parent=39 // pred_check_branch
        %443 = sbr.rel (%p441) target = $region44
      $region43: #{conv_block_forward.1} parent=39 // pred_region
        %p444 = scmp.lt.s32.totalorder %s15, 1
        %s445 = scalar_select %p444, %s15, 1
        %s446 = smul.addr %s445, 2
        %s447 = smul.addr %s446, 8
        %s448 = scalar_lea.vmem %s3, %s447
      $region44: #{conv_block_forward.1} parent=39 // pred_fallthru
        _
    $region40: #{conv_block_forward.1} parent=5 // pred_fallthru
      _
  $region6: #{conv_block_forward.1} parent=0 // loop_footer
    %s13 = sadd.s32 1, %s9
  $region7: #{conv_block_forward.1} parent=0 // loop_footer_branch
    %8 = sbr.rel target = $region3
  $region8: #{conv_block_forward.1} parent=0 // loop_exit
    _

</llo_original>
